<compile_context>
chip_gen: v6e
topology: v6e:2x2x1
jax: 0.10.0
libtpu: 0.0.40
codegen_flags: <defaults>
</compile_context>

<pallas_src>
import math
import functools

import jax
import jax.numpy as jnp
from jax import lax
from jax.experimental import pallas as pl
from jax.experimental.pallas import tpu as pltpu


_INV_SQRT2 = 1.0 / math.sqrt(2.0)


def _mlm_head_kernel(x_ref, wd_ref, bd_ref, g_ref, beta_ref, wdec_ref,
                     bdec_ref, o_ref, *, eps):
    # x tile arrives in its original dtype (f32); cast to bf16 for the MXU.
    # The VPU cast hides under the MXU and avoids a wrapper-side HBM pass.
    x = x_ref[...].astype(jnp.bfloat16)

    # dense: [TM, H] @ [H, H] on the MXU (bf16 in, f32 accumulate) + f32 bias
    h = jnp.dot(x, wd_ref[...], preferred_element_type=jnp.float32)
    h = h + bd_ref[...]

    # erf-based GELU (exactly the PyTorch `gelu` helper), in f32
    h = h * 0.5 * (1.0 + lax.erf(h * _INV_SQRT2))

    # LayerNorm over the hidden axis, f32, stable two-pass variance
    mean = jnp.mean(h, axis=-1, keepdims=True)
    centered = h - mean
    var = jnp.mean(centered * centered, axis=-1, keepdims=True)
    h = centered * lax.rsqrt(var + jnp.float32(eps))
    h = h * g_ref[...] + beta_ref[...]

    # decoder: [TM, H] @ [H, 768] on the MXU (bf16 in, f32 accumulate) + bias
    out = jnp.dot(h.astype(jnp.bfloat16), wdec_ref[...],
                  preferred_element_type=jnp.float32)
    o_ref[...] = (out + bdec_ref[...]).astype(o_ref.dtype)


def _vmem_limit_bytes():
    """Generation-aware scoped-VMEM limit with headroom for Mosaic scratch."""
    try:
        cap = int(pltpu.get_tpu_info().vmem_capacity_bytes)
    except Exception:
        cap = 64 << 20  # conservative: true on every TPU generation
    return max(min(cap - (12 << 20), 100 << 20), 16 << 20)


def _pick_token_tile(n_tokens, tm_max, *, h, v, x_itemsize, out_itemsize,
                     resident_bytes, vmem_limit):
    """Pick the largest token tile that fits the VMEM budget, then shrink so
    the 1-D grid has >= 4 steps when possible (keeps both v7x TensorCores
    busy).  Kept a multiple of 16 for bf16 sublane packing, floor at 16."""
    # per-token VMEM: double-buffered x tile + double-buffered out tile
    # + f32 intermediates (h, centered, ...) inside the body
    per_token = 2 * h * x_itemsize + 2 * v * out_itemsize + 3 * h * 4
    budget = max(vmem_limit - resident_bytes - (8 << 20), 1 << 20)
    tm = max(16, tm_max)
    while tm > 16 and tm * per_token > budget:
        tm //= 2
    while tm > 16 and pl.cdiv(n_tokens, tm) < 4:
        tm //= 2
    return max(16, (tm // 16) * 16)


def _run_mlm_head(x2d, params, *, eps, tm_eff, vmem_limit, out_dtype,
                  single_buffer_weights):
    n_pad, H = x2d.shape
    V = params["w_dec"].shape[1]

    if single_buffer_weights:
        # constant index_map -> never re-fetched; single-buffer to halve VMEM
        def const_spec(shape):
            return pl.BlockSpec(shape, lambda i: (0, 0),
                                pipeline_mode=pl.Buffered(1))
    else:
        def const_spec(shape):
            return pl.BlockSpec(shape, lambda i: (0, 0))

    out_itemsize = jnp.dtype(out_dtype).itemsize
    cost = pl.CostEstimate(
        flops=2 * n_pad * (H * H + H * V),
        transcendentals=n_pad * H,                       # erf
        bytes_accessed=(n_pad * H * x2d.dtype.itemsize   # x (f32 in)
                        + n_pad * V * out_itemsize       # out
                        + H * H * 2 + H * V * 2          # bf16 weights
                        + (3 * H + V) * 4),              # f32 biases/LN params
    )

    return pl.pallas_call(
        functools.partial(_mlm_head_kernel, eps=eps),
        out_shape=jax.ShapeDtypeStruct((n_pad, V), out_dtype),
        grid_spec=pltpu.PrefetchScalarGridSpec(
            num_scalar_prefetch=0,
            grid=(n_pad // tm_eff,),
            in_specs=[
                pl.BlockSpec((tm_eff, H), lambda i: (i, 0)),   # x tile (f32)
                const_spec((H, H)),                            # dense weight (bf16)
                const_spec((1, H)),                            # dense bias (f32)
                const_spec((1, H)),                            # LN gamma (f32)
                const_spec((1, H)),                            # LN beta (f32)
                const_spec((H, V)),                            # decoder weight (bf16)
                const_spec((1, V)),                            # decoder bias (f32)
            ],
            out_specs=pl.BlockSpec((tm_eff, V), lambda i: (i, 0)),
        ),
        compiler_params=pltpu.CompilerParams(
            dimension_semantics=("parallel",),
            vmem_limit_bytes=vmem_limit),
        cost_estimate=cost,
    )(x2d, params["w_dense"], params["b_dense"], params["ln_g"],
      params["ln_b"], params["w_dec"], params["b_dec"])


def visual_only_mlm_head(x, params, *, eps=1e-12, tm=1024, out_dtype=None):
    """x: [B, S, H] -> [B, S, 768].

    out_dtype defaults to x.dtype; pass jnp.bfloat16 to halve output writeback
    if downstream consumers allow it (768 stays a multiple of 128 either way).
    """
    B, S, H = x.shape
    V = params["w_dec"].shape[1]  # 768
    N = B * S
    out_dtype = x.dtype if out_dtype is None else jnp.dtype(out_dtype)

    vmem_limit = _vmem_limit_bytes()
    resident = H * H * 2 + H * V * 2 + (3 * H + V) * 4  # single-buffered weights
    tm_eff = _pick_token_tile(
        N, tm, h=H, v=V,
        x_itemsize=jnp.dtype(x.dtype).itemsize,
        out_itemsize=jnp.dtype(out_dtype).itemsize,
        resident_bytes=resident, vmem_limit=vmem_limit)

    n_pad = pl.cdiv(N, tm_eff) * tm_eff
    x2d = x.reshape(N, H)
    if n_pad != N:  # only ragged N pays a pad pass
        x2d = jnp.pad(x2d, ((0, n_pad - N), (0, 0)))

    try:
        out2d = _run_mlm_head(x2d, params, eps=eps, tm_eff=tm_eff,
                              vmem_limit=vmem_limit, out_dtype=out_dtype,
                              single_buffer_weights=True)
    except Exception:
        # pl.Buffered(1) not supported by this JAX/Mosaic build:
        # fall back to the default (double-buffered) weight blocks.
        out2d = _run_mlm_head(x2d, params, eps=eps, tm_eff=tm_eff,
                              vmem_limit=vmem_limit, out_dtype=out_dtype,
                              single_buffer_weights=False)

    return out2d[:N].reshape(B, S, V)


def init_params(key, hidden_size, vocab=768):
    k1, k2, k3 = jax.random.split(key, 3)
    # NOTE: for best MXU/lane utilization choose hidden_size as a multiple of
    # 128 (ideally 256) at the model-config level.
    params = {
        # dense Linear(H, H): stored transposed as [in, out], bf16 for the MXU
        "w_dense": (jax.random.normal(k1, (hidden_size, hidden_size),
                                      jnp.float32) * 0.02).astype(jnp.bfloat16),
        "b_dense": (jax.random.normal(k2, (1, hidden_size), jnp.float32) * 0.02),
        # LayerNorm params (PyTorch init: weight=1, bias=0), f32
        "ln_g": jnp.ones((1, hidden_size), jnp.float32),
        "ln_b": jnp.zeros((1, hidden_size), jnp.float32),
        # decoder Linear(H, 768): stored transposed as [in, out], bf16
        "w_dec": (jax.random.normal(k3, (hidden_size, vocab),
                                    jnp.float32) * 0.02).astype(jnp.bfloat16),
        # decoder bias = nn.Parameter(torch.zeros(768)), f32
        "b_dec": jnp.zeros((1, vocab), jnp.float32),
    }
    return params


def _reference(x, params, eps=1e-12):
    # pure-JAX f32 reference (weights upcast from bf16)
    w_d = params["w_dense"].astype(jnp.float32)
    w_v = params["w_dec"].astype(jnp.float32)
    h = jnp.einsum("bsh,hk->bsk", x.astype(jnp.float32), w_d) + params["b_dense"][0]
    h = h * 0.5 * (1.0 + lax.erf(h / jnp.float32(math.sqrt(2.0))))
    mean = jnp.mean(h, axis=-1, keepdims=True)
    var = jnp.mean((h - mean) ** 2, axis=-1, keepdims=True)
    h = (h - mean) * lax.rsqrt(var + eps) * params["ln_g"][0] + params["ln_b"][0]
    return jnp.einsum("bsh,hv->bsv", h, w_v) + params["b_dec"][0]


if __name__ == "__main__":
    key = jax.random.PRNGKey(0)
    kx1, kx2, kx3, kp1, kp2 = jax.random.split(key, 5)

    # case 1: tiny input (tile auto-shrinks, single grid step)
    H = 32
    params = init_params(kp1, H)
    x = jax.random.normal(kx1, (2, 8, H), jnp.float32)
    out = jax.block_until_ready(visual_only_mlm_head(x, params))
    ref = _reference(x, params)
    assert out.shape == (2, 8, 768)
    assert jnp.allclose(out, ref, atol=2e-2, rtol=2e-2)

    # case 2: ragged token count (exercises padding + multi-step parallel grid)
    x2 = jax.random.normal(kx2, (2, 100, H), jnp.float32)
    out2 = jax.block_until_ready(visual_only_mlm_head(x2, params))
    ref2 = _reference(x2, params)
    assert out2.shape == (2, 100, 768)
    assert jnp.allclose(out2, ref2, atol=2e-2, rtol=2e-2)

    # case 3: lane-dense hidden size (H multiple of 128)
    H3 = 128
    params3 = init_params(kp2, H3)
    x3 = jax.random.normal(kx3, (2, 40, H3), jnp.float32)
    out3 = jax.block_until_ready(visual_only_mlm_head(x3, params3))
    ref3 = _reference(x3, params3)
    assert out3.shape == (2, 40, 768)
    assert jnp.allclose(out3, ref3, atol=2e-2, rtol=2e-2)

    print("KERNEL_OK")
</pallas_src>

<mosaic_0001>
module attributes {stable_mosaic.version = 11 : i64} {
  func.func @_mlm_head_kernel(%arg0: i32, %arg1: memref<16x32xf32, #tpu.memory_space<vmem>>, %arg2: memref<32x32xbf16, #tpu.memory_space<vmem>>, %arg3: memref<1x32xf32, #tpu.memory_space<vmem>>, %arg4: memref<1x32xf32, #tpu.memory_space<vmem>>, %arg5: memref<1x32xf32, #tpu.memory_space<vmem>>, %arg6: memref<32x768xbf16, #tpu.memory_space<vmem>>, %arg7: memref<1x768xf32, #tpu.memory_space<vmem>>, %arg8: memref<16x768xf32, #tpu.memory_space<vmem>>) attributes {dimension_semantics = [#tpu.dimension_semantics<parallel>], iteration_bounds = array<i64: 1>, scalar_prefetch = 0 : i64, scratch_operands = 0 : i64, tpu.core_type = #tpu.core_type<tc>, window_params = [{transform_indices = @transform_0, window_bounds = array<i64: 16, 32>}, {pipeline_mode = #tpu.pipeline_mode<synchronous>, transform_indices = @transform_1, window_bounds = array<i64: 32, 32>}, {pipeline_mode = #tpu.pipeline_mode<synchronous>, transform_indices = @transform_2, window_bounds = array<i64: 1, 32>}, {pipeline_mode = #tpu.pipeline_mode<synchronous>, transform_indices = @transform_3, window_bounds = array<i64: 1, 32>}, {pipeline_mode = #tpu.pipeline_mode<synchronous>, transform_indices = @transform_4, window_bounds = array<i64: 1, 32>}, {pipeline_mode = #tpu.pipeline_mode<synchronous>, transform_indices = @transform_5, window_bounds = array<i64: 32, 768>}, {pipeline_mode = #tpu.pipeline_mode<synchronous>, transform_indices = @transform_6, window_bounds = array<i64: 1, 768>}, {transform_indices = @transform_7, window_bounds = array<i64: 16, 768>}]} {
    %c0 = arith.constant 0 : index
    %c0_0 = arith.constant 0 : index
    %0 = vector.load %arg1[%c0, %c0_0] : memref<16x32xf32, #tpu.memory_space<vmem>>, vector<16x32xf32>
    %1 = arith.truncf %0 : vector<16x32xf32> to vector<16x32xbf16>
    %c0_1 = arith.constant 0 : index
    %c0_2 = arith.constant 0 : index
    %2 = vector.load %arg2[%c0_1, %c0_2] : memref<32x32xbf16, #tpu.memory_space<vmem>>, vector<32x32xbf16>
    %cst = arith.constant dense<0.000000e+00> : vector<16x32xf32>
    %3 = tpu.matmul %1, %2, %cst {dimension_numbers = #tpu.dot_dimension_numbers<[1], [0], [0], [1], [0, 0, 1, 1], [], []>} : vector<16x32xbf16>, vector<32x32xbf16>, vector<16x32xf32> -> vector<16x32xf32>
    %c0_3 = arith.constant 0 : index
    %c0_4 = arith.constant 0 : index
    %4 = vector.load %arg3[%c0_3, %c0_4] : memref<1x32xf32, #tpu.memory_space<vmem>>, vector<1x32xf32>
    %5 = vector.broadcast %4 : vector<1x32xf32> to vector<16x32xf32>
    %6 = arith.addf %3, %5 : vector<16x32xf32>
    %cst_5 = arith.constant 5.000000e-01 : f32
    %7 = vector.broadcast %cst_5 : f32 to vector<16x32xf32>
    %8 = arith.mulf %6, %7 : vector<16x32xf32>
    %cst_6 = arith.constant 0.707106769 : f32
    %9 = vector.broadcast %cst_6 : f32 to vector<16x32xf32>
    %10 = arith.mulf %6, %9 : vector<16x32xf32>
    %11 = math.erf %10 : vector<16x32xf32>
    %cst_7 = arith.constant 1.000000e+00 : f32
    %12 = vector.broadcast %cst_7 : f32 to vector<16x32xf32>
    %13 = arith.addf %12, %11 : vector<16x32xf32>
    %14 = arith.mulf %8, %13 : vector<16x32xf32>
    %cst_8 = arith.constant dense<0.000000e+00> : vector<16xf32>
    %15 = vector.multi_reduction <add>, %14, %cst_8 [1] : vector<16x32xf32> to vector<16xf32>
    %16 = vector.shape_cast %15 : vector<16xf32> to vector<16x1xf32>
    %cst_9 = arith.constant 3.200000e+01 : f32
    %17 = vector.broadcast %cst_9 : f32 to vector<16x1xf32>
    %18 = arith.divf %16, %17 : vector<16x1xf32>
    %19 = vector.broadcast %18 : vector<16x1xf32> to vector<16x32xf32>
    %20 = arith.subf %14, %19 : vector<16x32xf32>
    %21 = arith.mulf %20, %20 : vector<16x32xf32>
    %cst_10 = arith.constant dense<0.000000e+00> : vector<16xf32>
    %22 = vector.multi_reduction <add>, %21, %cst_10 [1] : vector<16x32xf32> to vector<16xf32>
    %23 = vector.shape_cast %22 : vector<16xf32> to vector<16x1xf32>
    %cst_11 = arith.constant 3.200000e+01 : f32
    %24 = vector.broadcast %cst_11 : f32 to vector<16x1xf32>
    %25 = arith.divf %23, %24 : vector<16x1xf32>
    %cst_12 = arith.constant 9.99999996E-13 : f32
    %26 = vector.broadcast %cst_12 : f32 to vector<16x1xf32>
    %27 = arith.addf %25, %26 : vector<16x1xf32>
    %28 = math.rsqrt %27 : vector<16x1xf32>
    %29 = vector.broadcast %28 : vector<16x1xf32> to vector<16x32xf32>
    %30 = arith.mulf %20, %29 : vector<16x32xf32>
    %c0_13 = arith.constant 0 : index
    %c0_14 = arith.constant 0 : index
    %31 = vector.load %arg4[%c0_13, %c0_14] : memref<1x32xf32, #tpu.memory_space<vmem>>, vector<1x32xf32>
    %32 = vector.broadcast %31 : vector<1x32xf32> to vector<16x32xf32>
    %33 = arith.mulf %30, %32 : vector<16x32xf32>
    %c0_15 = arith.constant 0 : index
    %c0_16 = arith.constant 0 : index
    %34 = vector.load %arg5[%c0_15, %c0_16] : memref<1x32xf32, #tpu.memory_space<vmem>>, vector<1x32xf32>
    %35 = vector.broadcast %34 : vector<1x32xf32> to vector<16x32xf32>
    %36 = arith.addf %33, %35 : vector<16x32xf32>
    %37 = arith.truncf %36 : vector<16x32xf32> to vector<16x32xbf16>
    %c0_17 = arith.constant 0 : index
    %c0_18 = arith.constant 0 : index
    %38 = vector.load %arg6[%c0_17, %c0_18] : memref<32x768xbf16, #tpu.memory_space<vmem>>, vector<32x768xbf16>
    %cst_19 = arith.constant dense<0.000000e+00> : vector<16x768xf32>
    %39 = tpu.matmul %37, %38, %cst_19 {dimension_numbers = #tpu.dot_dimension_numbers<[1], [0], [0], [1], [0, 0, 1, 1], [], []>} : vector<16x32xbf16>, vector<32x768xbf16>, vector<16x768xf32> -> vector<16x768xf32>
    %c0_20 = arith.constant 0 : index
    %c0_21 = arith.constant 0 : index
    %40 = vector.load %arg7[%c0_20, %c0_21] : memref<1x768xf32, #tpu.memory_space<vmem>>, vector<1x768xf32>
    %41 = vector.broadcast %40 : vector<1x768xf32> to vector<16x768xf32>
    %42 = arith.addf %39, %41 : vector<16x768xf32>
    %c0_22 = arith.constant 0 : index
    %c0_23 = arith.constant 0 : index
    %43 = vector.load %arg8[%c0_22, %c0_23] : memref<16x768xf32, #tpu.memory_space<vmem>>, vector<16x768xf32>
    tpu.vector_store %arg8[%c0_22, %c0_23], %42 {strides = array<i32>} : memref<16x768xf32, #tpu.memory_space<vmem>>, vector<16x768xf32>,
    return
  }
  func.func @transform_0(%arg0: i32) -> (i32, i32) {
    %c0_i32 = arith.constant 0 : i32
    %c0_i32_0 = arith.constant 0 : i32
    return %arg0, %c0_i32 : i32, i32
  }
  func.func @transform_1(%arg0: i32) -> (i32, i32) {
    %c0_i32 = arith.constant 0 : i32
    %c0_i32_0 = arith.constant 0 : i32
    %c0_i32_1 = arith.constant 0 : i32
    return %c0_i32, %c0_i32_0 : i32, i32
  }
  func.func @transform_2(%arg0: i32) -> (i32, i32) {
    %c0_i32 = arith.constant 0 : i32
    %c0_i32_0 = arith.constant 0 : i32
    %c0_i32_1 = arith.constant 0 : i32
    return %c0_i32, %c0_i32_0 : i32, i32
  }
  func.func @transform_3(%arg0: i32) -> (i32, i32) {
    %c0_i32 = arith.constant 0 : i32
    %c0_i32_0 = arith.constant 0 : i32
    %c0_i32_1 = arith.constant 0 : i32
    return %c0_i32, %c0_i32_0 : i32, i32
  }
  func.func @transform_4(%arg0: i32) -> (i32, i32) {
    %c0_i32 = arith.constant 0 : i32
    %c0_i32_0 = arith.constant 0 : i32
    %c0_i32_1 = arith.constant 0 : i32
    return %c0_i32, %c0_i32_0 : i32, i32
  }
  func.func @transform_5(%arg0: i32) -> (i32, i32) {
    %c0_i32 = arith.constant 0 : i32
    %c0_i32_0 = arith.constant 0 : i32
    %c0_i32_1 = arith.constant 0 : i32
    return %c0_i32, %c0_i32_0 : i32, i32
  }
  func.func @transform_6(%arg0: i32) -> (i32, i32) {
    %c0_i32 = arith.constant 0 : i32
    %c0_i32_0 = arith.constant 0 : i32
    %c0_i32_1 = arith.constant 0 : i32
    return %c0_i32, %c0_i32_0 : i32, i32
  }
  func.func @transform_7(%arg0: i32) -> (i32, i32) {
    %c0_i32 = arith.constant 0 : i32
    %c0_i32_0 = arith.constant 0 : i32
    return %arg0, %c0_i32 : i32, i32
  }
}

module attributes {stable_mosaic.version = 11 : i64} {
  func.func @_mlm_head_kernel(%arg0: i32, %arg1: memref<16x32xf32, #tpu.memory_space<vmem>>, %arg2: memref<32x32xbf16, #tpu.memory_space<vmem>>, %arg3: memref<1x32xf32, #tpu.memory_space<vmem>>, %arg4: memref<1x32xf32, #tpu.memory_space<vmem>>, %arg5: memref<1x32xf32, #tpu.memory_space<vmem>>, %arg6: memref<32x768xbf16, #tpu.memory_space<vmem>>, %arg7: memref<1x768xf32, #tpu.memory_space<vmem>>, %arg8: memref<16x768xf32, #tpu.memory_space<vmem>>) attributes {dimension_semantics = [#tpu.dimension_semantics<parallel>], iteration_bounds = array<i64: 1>, scalar_prefetch = 0 : i64, scratch_operands = 0 : i64, tpu.core_type = #tpu.core_type<tc>, window_params = [{transform_indices = @transform_0, window_bounds = array<i64: 16, 32>}, {pipeline_mode = #tpu.pipeline_mode<synchronous>, transform_indices = @transform_1, window_bounds = array<i64: 32, 32>}, {pipeline_mode = #tpu.pipeline_mode<synchronous>, transform_indices = @transform_2, window_bounds = array<i64: 1, 32>}, {pipeline_mode = #tpu.pipeline_mode<synchronous>, transform_indices = @transform_3, window_bounds = array<i64: 1, 32>}, {pipeline_mode = #tpu.pipeline_mode<synchronous>, transform_indices = @transform_4, window_bounds = array<i64: 1, 32>}, {pipeline_mode = #tpu.pipeline_mode<synchronous>, transform_indices = @transform_5, window_bounds = array<i64: 32, 768>}, {pipeline_mode = #tpu.pipeline_mode<synchronous>, transform_indices = @transform_6, window_bounds = array<i64: 1, 768>}, {transform_indices = @transform_7, window_bounds = array<i64: 16, 768>}]} {
    %c0 = arith.constant 0 : index
    %c0_0 = arith.constant 0 : index
    %0 = vector.load %arg1[%c0, %c0_0] : memref<16x32xf32, #tpu.memory_space<vmem>>, vector<16x32xf32>
    %1 = arith.truncf %0 : vector<16x32xf32> to vector<16x32xbf16>
    %c0_1 = arith.constant 0 : index
    %c0_2 = arith.constant 0 : index
    %2 = vector.load %arg2[%c0_1, %c0_2] : memref<32x32xbf16, #tpu.memory_space<vmem>>, vector<32x32xbf16>
    %cst = arith.constant dense<0.000000e+00> : vector<16x32xf32>
    %3 = tpu.matmul %1, %2, %cst {dimension_numbers = #tpu.dot_dimension_numbers<[1], [0], [0], [1], [0, 0, 1, 1], [], []>} : vector<16x32xbf16>, vector<32x32xbf16>, vector<16x32xf32> -> vector<16x32xf32>
    %c0_3 = arith.constant 0 : index
    %c0_4 = arith.constant 0 : index
    %4 = vector.load %arg3[%c0_3, %c0_4] : memref<1x32xf32, #tpu.memory_space<vmem>>, vector<1x32xf32>
    %5 = vector.broadcast %4 : vector<1x32xf32> to vector<16x32xf32>
    %6 = arith.addf %3, %5 : vector<16x32xf32>
    %cst_5 = arith.constant 5.000000e-01 : f32
    %7 = vector.broadcast %cst_5 : f32 to vector<16x32xf32>
    %8 = arith.mulf %6, %7 : vector<16x32xf32>
    %cst_6 = arith.constant 0.707106769 : f32
    %9 = vector.broadcast %cst_6 : f32 to vector<16x32xf32>
    %10 = arith.mulf %6, %9 : vector<16x32xf32>
    %11 = math.erf %10 : vector<16x32xf32>
    %cst_7 = arith.constant 1.000000e+00 : f32
    %12 = vector.broadcast %cst_7 : f32 to vector<16x32xf32>
    %13 = arith.addf %12, %11 : vector<16x32xf32>
    %14 = arith.mulf %8, %13 : vector<16x32xf32>
    %cst_8 = arith.constant dense<0.000000e+00> : vector<16xf32>
    %15 = vector.multi_reduction <add>, %14, %cst_8 [1] : vector<16x32xf32> to vector<16xf32>
    %16 = vector.shape_cast %15 : vector<16xf32> to vector<16x1xf32>
    %cst_9 = arith.constant 3.200000e+01 : f32
    %17 = vector.broadcast %cst_9 : f32 to vector<16x1xf32>
    %18 = arith.divf %16, %17 : vector<16x1xf32>
    %19 = vector.broadcast %18 : vector<16x1xf32> to vector<16x32xf32>
    %20 = arith.subf %14, %19 : vector<16x32xf32>
    %21 = arith.mulf %20, %20 : vector<16x32xf32>
    %cst_10 = arith.constant dense<0.000000e+00> : vector<16xf32>
    %22 = vector.multi_reduction <add>, %21, %cst_10 [1] : vector<16x32xf32> to vector<16xf32>
    %23 = vector.shape_cast %22 : vector<16xf32> to vector<16x1xf32>
    %cst_11 = arith.constant 3.200000e+01 : f32
    %24 = vector.broadcast %cst_11 : f32 to vector<16x1xf32>
    %25 = arith.divf %23, %24 : vector<16x1xf32>
    %cst_12 = arith.constant 9.99999996E-13 : f32
    %26 = vector.broadcast %cst_12 : f32 to vector<16x1xf32>
    %27 = arith.addf %25, %26 : vector<16x1xf32>
    %28 = math.rsqrt %27 : vector<16x1xf32>
    %29 = vector.broadcast %28 : vector<16x1xf32> to vector<16x32xf32>
    %30 = arith.mulf %20, %29 : vector<16x32xf32>
    %c0_13 = arith.constant 0 : index
    %c0_14 = arith.constant 0 : index
    %31 = vector.load %arg4[%c0_13, %c0_14] : memref<1x32xf32, #tpu.memory_space<vmem>>, vector<1x32xf32>
    %32 = vector.broadcast %31 : vector<1x32xf32> to vector<16x32xf32>
    %33 = arith.mulf %30, %32 : vector<16x32xf32>
    %c0_15 = arith.constant 0 : index
    %c0_16 = arith.constant 0 : index
    %34 = vector.load %arg5[%c0_15, %c0_16] : memref<1x32xf32, #tpu.memory_space<vmem>>, vector<1x32xf32>
    %35 = vector.broadcast %34 : vector<1x32xf32> to vector<16x32xf32>
    %36 = arith.addf %33, %35 : vector<16x32xf32>
    %37 = arith.truncf %36 : vector<16x32xf32> to vector<16x32xbf16>
    %c0_17 = arith.constant 0 : index
    %c0_18 = arith.constant 0 : index
    %38 = vector.load %arg6[%c0_17, %c0_18] : memref<32x768xbf16, #tpu.memory_space<vmem>>, vector<32x768xbf16>
    %cst_19 = arith.constant dense<0.000000e+00> : vector<16x768xf32>
    %39 = tpu.matmul %37, %38, %cst_19 {dimension_numbers = #tpu.dot_dimension_numbers<[1], [0], [0], [1], [0, 0, 1, 1], [], []>} : vector<16x32xbf16>, vector<32x768xbf16>, vector<16x768xf32> -> vector<16x768xf32>
    %c0_20 = arith.constant 0 : index
    %c0_21 = arith.constant 0 : index
    %40 = vector.load %arg7[%c0_20, %c0_21] : memref<1x768xf32, #tpu.memory_space<vmem>>, vector<1x768xf32>
    %41 = vector.broadcast %40 : vector<1x768xf32> to vector<16x768xf32>
    %42 = arith.addf %39, %41 : vector<16x768xf32>
    %c0_22 = arith.constant 0 : index
    %c0_23 = arith.constant 0 : index
    %43 = vector.load %arg8[%c0_22, %c0_23] : memref<16x768xf32, #tpu.memory_space<vmem>>, vector<16x768xf32>
    tpu.vector_store %arg8[%c0_22, %c0_23], %42 {strides = array<i32>} : memref<16x768xf32, #tpu.memory_space<vmem>>, vector<16x768xf32>,
    return
  }
  func.func @transform_0(%arg0: i32) -> (i32, i32) {
    %c0_i32 = arith.constant 0 : i32
    %c0_i32_0 = arith.constant 0 : i32
    return %arg0, %c0_i32 : i32, i32
  }
  func.func @transform_1(%arg0: i32) -> (i32, i32) {
    %c0_i32 = arith.constant 0 : i32
    %c0_i32_0 = arith.constant 0 : i32
    %c0_i32_1 = arith.constant 0 : i32
    return %c0_i32, %c0_i32_0 : i32, i32
  }
  func.func @transform_2(%arg0: i32) -> (i32, i32) {
    %c0_i32 = arith.constant 0 : i32
    %c0_i32_0 = arith.constant 0 : i32
    %c0_i32_1 = arith.constant 0 : i32
    return %c0_i32, %c0_i32_0 : i32, i32
  }
  func.func @transform_3(%arg0: i32) -> (i32, i32) {
    %c0_i32 = arith.constant 0 : i32
    %c0_i32_0 = arith.constant 0 : i32
    %c0_i32_1 = arith.constant 0 : i32
    return %c0_i32, %c0_i32_0 : i32, i32
  }
  func.func @transform_4(%arg0: i32) -> (i32, i32) {
    %c0_i32 = arith.constant 0 : i32
    %c0_i32_0 = arith.constant 0 : i32
    %c0_i32_1 = arith.constant 0 : i32
    return %c0_i32, %c0_i32_0 : i32, i32
  }
  func.func @transform_5(%arg0: i32) -> (i32, i32) {
    %c0_i32 = arith.constant 0 : i32
    %c0_i32_0 = arith.constant 0 : i32
    %c0_i32_1 = arith.constant 0 : i32
    return %c0_i32, %c0_i32_0 : i32, i32
  }
  func.func @transform_6(%arg0: i32) -> (i32, i32) {
    %c0_i32 = arith.constant 0 : i32
    %c0_i32_0 = arith.constant 0 : i32
    %c0_i32_1 = arith.constant 0 : i32
    return %c0_i32, %c0_i32_0 : i32, i32
  }
  func.func @transform_7(%arg0: i32) -> (i32, i32) {
    %c0_i32 = arith.constant 0 : i32
    %c0_i32_0 = arith.constant 0 : i32
    return %arg0, %c0_i32 : i32, i32
  }
}

</mosaic_0001>

<llo_original>
// kernel: tpu_custom_call.1
$region0: #{tpu_custom_call.1}
  #allocation0 [shape = 'u32[]', space=smem, size = 0x4, offset = 0x4, fixed_abs, tag = 'smem constant byte address 0x4 - core index']
  #allocation1 [shape = 'u32[144,128]{1,0:T(1,128)}', space=vmem, size = 0x12000, scoped, tag = 'internal scratch']
  %s0 = inlined_call_operand.hbm [shape: f32[16,32], index: 0, kind: input, shape index: {}]
  %s1 = inlined_call_operand.hbm [shape: bf16[32,32], index: 1, kind: input, shape index: {}]
  %s2 = inlined_call_operand.vmem [shape: f32[1,32], index: 2, kind: input, shape index: {}]
  %s3 = inlined_call_operand.vmem [shape: f32[1,32], index: 3, kind: input, shape index: {}]
  %s4 = inlined_call_operand.vmem [shape: f32[1,32], index: 4, kind: input, shape index: {}]
  %s5 = inlined_call_operand.hbm [shape: bf16[32,768], index: 5, kind: input, shape index: {}]
  %s6 = inlined_call_operand.vmem [shape: f32[1,768], index: 6, kind: input, shape index: {}]
  %s7 = inlined_call_operand.hbm [shape: f32[16,768], index: 7, kind: output, shape index: {}]
  %s8 = sld [smem:[#allocation0]]
  $region50: #{tpu_custom_call.1} parent=0
    _
  %s10 = ssub.s32 1, %s8
  %s11 = scalar_select 0, %s10, %s8
  $region1: #{tpu_custom_call.1} parent=0
    #allocation2 [shape = 'u8[8192]{0}', space=vmem, size = 0x2000, scoped, tag = 'input window, operand 0, single buffered']
    #allocation3 [shape = 's32[1]{0}', space=sflag, size = 0x4, scoped, tag = 'scoped memory for tpu_custom_call.1']
    #allocation4 [shape = 's32[1]{0}', space=sflag, size = 0x4, scoped, tag = 'scoped memory for tpu_custom_call.1']
    #allocation5 [shape = 'u8[8192]{0}', space=vmem, size = 0x2000, scoped, tag = 'input window, operand 1, single buffered']
    #allocation6 [shape = 's32[1]{0}', space=sflag, size = 0x4, scoped, tag = 'scoped memory for tpu_custom_call.1']
    #allocation7 [shape = 'u8[49152]{0}', space=vmem, size = 0xc000, scoped, tag = 'input window, operand 5, single buffered']
    #allocation8 [shape = 'u8[49152]{0}', space=vmem, size = 0xc000, scoped, tag = 'output window, operand 0, single buffered']
    %12 = vsyncpa [#allocation3], 0
    %13 = vsyncpa [#allocation6], 0
    %14 = vsyncpa [#allocation4], 0
    // Predicated region
    $region2: #{tpu_custom_call.1} parent=1 // pred_check
      _
    $region3: #{tpu_custom_call.1} parent=1 // pred_check_branch
      %16 = sbr.rel (0) target = $region5
    $region4: #{tpu_custom_call.1} parent=1 // pred_region
      %s18 = ssub.s32 256, 256
      %19 = vsyncadd [#allocation3], %s18
      %s20 = sshll.u32 [#allocation2], 4
      %s21 = int_to_ptr.vmem [resolvable:$true] %s20
      %26 = dma.hbm_to_vmem [thread:$0]  %s0, 256, %s21, [#allocation3], 128, 128, 8
    $region5: #{tpu_custom_call.1} parent=1 // pred_fallthru
      _
    // Predicated region
    $region6: #{tpu_custom_call.1} parent=1 // pred_check
      _
    $region7: #{tpu_custom_call.1} parent=1 // pred_check_branch
      %28 = sbr.rel (0) target = $region9
    $region8: #{tpu_custom_call.1} parent=1 // pred_region
      %s30 = ssub.s32 256, 256
      %31 = vsyncadd [#allocation6], %s30
      %s32 = sshll.u32 [#allocation5], 4
      %s33 = int_to_ptr.vmem [resolvable:$true] %s32
      %38 = dma.hbm_to_vmem [thread:$0]  %s1, 256, %s33, [#allocation6], 64, 64, 4
    $region9: #{tpu_custom_call.1} parent=1 // pred_fallthru
      _
    // Predicated region
    $region10: #{tpu_custom_call.1} parent=1 // pred_check
      _
    $region11: #{tpu_custom_call.1} parent=1 // pred_check_branch
      %40 = sbr.rel (0) target = $region13
    $region12: #{tpu_custom_call.1} parent=1 // pred_region
      _
    $region13: #{tpu_custom_call.1} parent=1 // pred_fallthru
      _
    // Predicated region
    $region14: #{tpu_custom_call.1} parent=1 // pred_check
      _
    $region15: #{tpu_custom_call.1} parent=1 // pred_check_branch
      %42 = sbr.rel (0) target = $region17
    $region16: #{tpu_custom_call.1} parent=1 // pred_region
      _
    $region17: #{tpu_custom_call.1} parent=1 // pred_fallthru
      _
    // Predicated region
    $region18: #{tpu_custom_call.1} parent=1 // pred_check
      _
    $region19: #{tpu_custom_call.1} parent=1 // pred_check_branch
      %44 = sbr.rel (0) target = $region21
    $region20: #{tpu_custom_call.1} parent=1 // pred_region
      _
    $region21: #{tpu_custom_call.1} parent=1 // pred_fallthru
      _
    // Predicated region
    $region22: #{tpu_custom_call.1} parent=1 // pred_check
      _
    $region23: #{tpu_custom_call.1} parent=1 // pred_check_branch
      %46 = sbr.rel (0) target = $region25
    $region24: #{tpu_custom_call.1} parent=1 // pred_region
      %s48 = ssub.s32 1536, 1536
      %49 = vsyncadd [#allocation6], %s48
      %s50 = sshll.u32 [#allocation7], 4
      %s51 = int_to_ptr.vmem [resolvable:$true] %s50
      %56 = dma.hbm_to_vmem [thread:$0]  %s5, 1536, %s51, [#allocation6], 384, 384, 24
    $region25: #{tpu_custom_call.1} parent=1 // pred_fallthru
      _
    // Predicated region
    $region26: #{tpu_custom_call.1} parent=1 // pred_check
      _
    $region27: #{tpu_custom_call.1} parent=1 // pred_check_branch
      %58 = sbr.rel (0) target = $region29
    $region28: #{tpu_custom_call.1} parent=1 // pred_region
      _
    $region29: #{tpu_custom_call.1} parent=1 // pred_fallthru
      _
    // Predicated region
    $region30: #{tpu_custom_call.1} parent=1 // pred_check
      _
    $region31: #{tpu_custom_call.1} parent=1 // pred_check_branch
      %60 = sbr.rel (0) target = $region33
    $region32: #{tpu_custom_call.1} parent=1 // pred_region
      %61 = dma.done [#allocation3], 256
    $region33: #{tpu_custom_call.1} parent=1 // pred_fallthru
      _
    // Predicated region
    $region34: #{tpu_custom_call.1} parent=1 // pred_check
      _
    $region35: #{tpu_custom_call.1} parent=1 // pred_check_branch
      %63 = sbr.rel (0) target = $region37
    $region36: #{tpu_custom_call.1} parent=1 // pred_region
      %64 = dma.done [#allocation6], 256
    $region37: #{tpu_custom_call.1} parent=1 // pred_fallthru
      _
    // Predicated region
    $region38: #{tpu_custom_call.1} parent=1 // pred_check
      _
    $region39: #{tpu_custom_call.1} parent=1 // pred_check_branch
      %66 = sbr.rel (0) target = $region41
    $region40: #{tpu_custom_call.1} parent=1 // pred_region
      %67 = dma.done [#allocation6], 1536
    $region41: #{tpu_custom_call.1} parent=1 // pred_fallthru
      _
    %v69 = vld [vmem:[#allocation2] sm:$0xff]
    %v70 = vld [vmem:[#allocation2 + $0x8] sm:$0xff]
    %v71 = vpack.c.bf16 %v70, %v69
    %v72 = vld [vmem:[#allocation5] sm:$0xf]
    %v73 = vld [vmem:[#allocation5 + $0x4] sm:$0xf]
    %v74 = vld [vmem:[#allocation5 + $0x8] sm:$0xf]
    %v75 = vld [vmem:[#allocation5 + $0xc] sm:$0xf]
    %v76 = vld [vmem:[%s2] sm:$0x1]
    %v78 = vlaneseq
    %v79 = vshrl.u32 %v78, 7
    %v80 = vsub.s32 0, %v79
    %v81 = vrot.slane %v76, %v80
    %v87 = vunpack.c.l.b16 %v72
    %v88 = vunpack.c.l.b16 %v73
    %v89 = vunpack.c.l.b16 %v74
    %v90 = vunpack.c.l.b16 %v75
    %v91 = vpack.c.b16 %v88, %v87
    %v92 = vpack.c.b16 %v90, %v89
    %vm95 = vcmask 261120
    %v97 = vsel %vm95, %v71, 0
    %99 = vmatprep.subr.bf16.mxu0 0
    %100 = vmatpush1.bf16.msra.mxu0 0
    %101 = vmatprep.subr.bf16.mxu0 0
    %102 = vmatpush1.bf16.msra.mxu0 0
    %103 = vmatprep.subr.bf16.mxu0 0
    %104 = vmatpush1.bf16.msra.mxu0 0
    %105 = vmatprep.subr.bf16.mxu0 0
    %106 = vmatpush1.bf16.msra.mxu0 0
    %107 = vmatprep.subr.bf16.mxu0 0
    %108 = vmatpush1.bf16.msra.mxu0 0
    %109 = vmatprep.subr.bf16.mxu0 0
    %110 = vmatpush1.bf16.msra.mxu0 0
    %111 = vmatprep.subr.bf16.mxu0 0
    %112 = vmatpush1.bf16.msra.mxu0 %v92
    %113 = vmatprep.subr.bf16.mxu0 0
    %114 = vmatpush1.bf16.msra.mxu0 %v91
    %115 = vmatprep.subr.bf16.mxu0 0
    %116 = vmatpush2.bf16.msra.mxu0 0
    %117 = vmatprep.subr.bf16.mxu0 0
    %118 = vmatpush2.bf16.msra.mxu0 0
    %119 = vmatprep.subr.bf16.mxu0 0
    %120 = vmatpush2.bf16.msra.mxu0 0
    %121 = vmatprep.subr.bf16.mxu0 0
    %122 = vmatpush2.bf16.msra.mxu0 0
    %123 = vmatprep.subr.bf16.mxu0 0
    %124 = vmatpush2.bf16.msra.mxu0 0
    %125 = vmatprep.subr.bf16.mxu0 0
    %126 = vmatpush2.bf16.msra.mxu0 0
    %127 = vmatprep.subr.bf16.mxu0 0
    %128 = vmatpush2.bf16.msra.mxu0 0
    %129 = vmatprep.subr.bf16.mxu0 0
    %130 = vmatpush2.bf16.msra.mxu0 0
    %131 = vmatprep.mubr.bf16.mxu0 0
    %132 = vmatmul.mubr.bf16.gmra.mxu0 %v97
    %v133 = vpop.f32.mrf.mxu0
    %v134 = vadd.f32 %v81, %v133
    %v135 = vpop.f32.mrf.mxu0
    %v136 = vpop.f32.mrf.mxu0
    %v137 = vadd.f32 %v81, %v136
    %v138 = vpop.f32.mrf.mxu0
    %139 = vdwg.mxu0
    %v140 = vmul.f32 %v134, 0.5
    %v141 = vmul.f32 %v137, 0.5
    %v142 = vmul.f32 %v134, 0.70710677
    %v143 = vmul.f32 %v137, 0.70710677
    %v144 = verf.f32.pop %v142
    %v145 = verf.f32.pop %v143
    %v146 = vadd.f32 %v144, 1.0
    %v147 = vadd.f32 %v145, 1.0
    %v148 = vmul.f32 %v140, %v146
    %v149 = vmul.f32 %v141, %v147
    %v150 = vsel %vm95, %v148, 0.0
    %151 = vadd.xlane.f32.xlu0 %v150
    %v152 = vpop.xlane.xlu0 %151
    %v153 = vsel %vm95, %v149, 0.0
    %154 = vadd.xlane.f32.xlu0 %v153
    %v155 = vpop.xlane.xlu0 %154
    %v156 = vrcp.pop 32.0
    %v157 = vmul.f32 %v152, %v156
    %v158 = vmul.f32 %v155, %v156
    %v159 = vsub.f32 %v148, %v157
    %v160 = vsub.f32 %v149, %v158
    %v161 = vmul.f32 %v159, %v159
    %v162 = vmul.f32 %v160, %v160
    %v163 = vsel %vm95, %v161, 0.0
    %164 = vadd.xlane.f32.xlu0 %v163
    %v165 = vpop.xlane.xlu0 %164
    %v166 = vsel %vm95, %v162, 0.0
    %167 = vadd.xlane.f32.xlu0 %v166
    %v168 = vpop.xlane.xlu0 %167
    %v169 = vmul.f32 %v165, %v156
    %v170 = vmul.f32 %v168, %v156
    %v171 = vadd.f32 %v169, 1e-12
    %v172 = vadd.f32 %v170, 1e-12
    %v173 = vrsqrt.pop %v171
    %v174 = vrsqrt.pop %v172
    %v175 = vmul.f32 %v159, %v173
    %v176 = vmul.f32 %v160, %v174
    %v177 = vld [vmem:[%s3] sm:$0x1]
    %v179 = vlaneseq
    %v180 = vshrl.u32 %v179, 7
    %v181 = vsub.s32 0, %v180
    %v182 = vrot.slane %v177, %v181
    %v184 = vmul.f32 %v175, %v182
    %v185 = vmul.f32 %v176, %v182
    %v186 = vld [vmem:[%s4] sm:$0x1]
    %v188 = vlaneseq
    %v189 = vshrl.u32 %v188, 7
    %v190 = vsub.s32 0, %v189
    %v191 = vrot.slane %v186, %v190
    %v193 = vadd.f32 %v184, %v191
    %v194 = vadd.f32 %v185, %v191
    %v195 = vpack.c.bf16 %v194, %v193
    %v196 = vld [vmem:[#allocation7] sm:$0xff]
    %v197 = vld [vmem:[#allocation7 + $0x8] sm:$0xff]
    %v198 = vld [vmem:[#allocation7 + $0x10] sm:$0xff]
    %v199 = vld [vmem:[#allocation7 + $0x18] sm:$0xff]
    %v200 = vld [vmem:[#allocation7 + $0x20] sm:$0xff]
    %v201 = vld [vmem:[#allocation7 + $0x28] sm:$0xff]
    %v202 = vld [vmem:[#allocation7 + $0x30] sm:$0xff]
    %v203 = vld [vmem:[#allocation7 + $0x38] sm:$0xff]
    %v204 = vld [vmem:[#allocation7 + $0x40] sm:$0xff]
    %v205 = vld [vmem:[#allocation7 + $0x48] sm:$0xff]
    %v206 = vld [vmem:[#allocation7 + $0x50] sm:$0xff]
    %v207 = vld [vmem:[#allocation7 + $0x58] sm:$0xff]
    %v208 = vld [vmem:[%s6] sm:$0x3f]
    %v210 = vlaneseq
    %v211 = vshrl.u32 %v210, 7
    %v212 = vsub.s32 0, %v211
    %v213 = vrot.slane %v208, %v212
    %v214 = vlaneseq
    %v215 = vshrl.u32 %v214, 7
    %v216 = vsub.s32 1, %v215
    %v217 = vrot.slane %v208, %v216
    %v218 = vlaneseq
    %v219 = vshrl.u32 %v218, 7
    %v220 = vsub.s32 2, %v219
    %v221 = vrot.slane %v208, %v220
    %v222 = vlaneseq
    %v223 = vshrl.u32 %v222, 7
    %v224 = vsub.s32 3, %v223
    %v225 = vrot.slane %v208, %v224
    %v226 = vlaneseq
    %v227 = vshrl.u32 %v226, 7
    %v228 = vsub.s32 4, %v227
    %v229 = vrot.slane %v208, %v228
    %v230 = vlaneseq
    %v231 = vshrl.u32 %v230, 7
    %v232 = vsub.s32 5, %v231
    %v233 = vrot.slane %v208, %v232
    %v252 = vunpack.c.l.b16 %v196
    %v253 = vunpack.c.h.b16 %v196
    %v254 = vunpack.c.l.b16 %v197
    %v255 = vunpack.c.h.b16 %v197
    %v256 = vunpack.c.l.b16 %v198
    %v257 = vunpack.c.h.b16 %v198
    %v258 = vunpack.c.l.b16 %v199
    %v259 = vunpack.c.h.b16 %v199
    %v260 = vunpack.c.l.b16 %v200
    %v261 = vunpack.c.h.b16 %v200
    %v262 = vunpack.c.l.b16 %v201
    %v263 = vunpack.c.h.b16 %v201
    %v264 = vunpack.c.l.b16 %v202
    %v265 = vunpack.c.h.b16 %v202
    %v266 = vunpack.c.l.b16 %v203
    %v267 = vunpack.c.h.b16 %v203
    %v268 = vunpack.c.l.b16 %v204
    %v269 = vunpack.c.h.b16 %v204
    %v270 = vunpack.c.l.b16 %v205
    %v271 = vunpack.c.h.b16 %v205
    %v272 = vunpack.c.l.b16 %v206
    %v273 = vunpack.c.h.b16 %v206
    %v274 = vunpack.c.l.b16 %v207
    %v275 = vunpack.c.h.b16 %v207
    %v276 = vpack.c.b16 %v258, %v252
    %v277 = vpack.c.b16 %v259, %v253
    %v278 = vpack.c.b16 %v260, %v254
    %v279 = vpack.c.b16 %v261, %v255
    %v280 = vpack.c.b16 %v262, %v256
    %v281 = vpack.c.b16 %v263, %v257
    %v282 = vpack.c.b16 %v270, %v264
    %v283 = vpack.c.b16 %v271, %v265
    %v284 = vpack.c.b16 %v272, %v266
    %v285 = vpack.c.b16 %v273, %v267
    %v286 = vpack.c.b16 %v274, %v268
    %v287 = vpack.c.b16 %v275, %v269
    %v301 = vsel %vm95, %v195, 0
    %303 = vmatprep.subr.bf16.mxu0 0
    %304 = vmatpush1.bf16.msra.mxu0 0
    %305 = vmatprep.subr.bf16.mxu0 0
    %306 = vmatpush1.bf16.msra.mxu0 0
    %307 = vmatprep.subr.bf16.mxu0 0
    %308 = vmatpush1.bf16.msra.mxu0 0
    %309 = vmatprep.subr.bf16.mxu0 0
    %310 = vmatpush1.bf16.msra.mxu0 0
    %311 = vmatprep.subr.bf16.mxu0 0
    %312 = vmatpush1.bf16.msra.mxu0 0
    %313 = vmatprep.subr.bf16.mxu0 0
    %314 = vmatpush1.bf16.msra.mxu0 0
    %315 = vmatprep.subr.bf16.mxu0 %v283
    %316 = vmatpush1.bf16.msra.mxu0 %v282
    %317 = vmatprep.subr.bf16.mxu0 %v277
    %318 = vmatpush1.bf16.msra.mxu0 %v276
    %319 = vmatprep.subr.bf16.mxu0 0
    %320 = vmatpush2.bf16.msra.mxu0 0
    %321 = vmatprep.subr.bf16.mxu0 0
    %322 = vmatpush2.bf16.msra.mxu0 0
    %323 = vmatprep.subr.bf16.mxu0 0
    %324 = vmatpush2.bf16.msra.mxu0 0
    %325 = vmatprep.subr.bf16.mxu0 0
    %326 = vmatpush2.bf16.msra.mxu0 0
    %327 = vmatprep.subr.bf16.mxu0 0
    %328 = vmatpush2.bf16.msra.mxu0 0
    %329 = vmatprep.subr.bf16.mxu0 0
    %330 = vmatpush2.bf16.msra.mxu0 0
    %331 = vmatprep.subr.bf16.mxu0 0
    %332 = vmatpush2.bf16.msra.mxu0 0
    %333 = vmatprep.subr.bf16.mxu0 0
    %334 = vmatpush2.bf16.msra.mxu0 0
    %335 = vmatprep.mubr.bf16.mxu0 0
    %336 = vmatmul.mubr.bf16.gmra.mxu0 %v301
    %v337 = vpop.f32.mrf.mxu0
    %v338 = vadd.f32 %v213, %v337
    %v339 = vpop.f32.mrf.mxu0
    %v340 = vadd.f32 %v217, %v339
    %v341 = vpop.f32.mrf.mxu0
    %v342 = vadd.f32 %v213, %v341
    %v343 = vpop.f32.mrf.mxu0
    %v344 = vadd.f32 %v217, %v343
    %345 = vdwg.mxu0
    %346 = vmatprep.subr.bf16.mxu0 0
    %347 = vmatpush1.bf16.msra.mxu0 0
    %348 = vmatprep.subr.bf16.mxu0 0
    %349 = vmatpush1.bf16.msra.mxu0 0
    %350 = vmatprep.subr.bf16.mxu0 0
    %351 = vmatpush1.bf16.msra.mxu0 0
    %352 = vmatprep.subr.bf16.mxu0 0
    %353 = vmatpush1.bf16.msra.mxu0 0
    %354 = vmatprep.subr.bf16.mxu0 0
    %355 = vmatpush1.bf16.msra.mxu0 0
    %356 = vmatprep.subr.bf16.mxu0 0
    %357 = vmatpush1.bf16.msra.mxu0 0
    %358 = vmatprep.subr.bf16.mxu0 %v285
    %359 = vmatpush1.bf16.msra.mxu0 %v284
    %360 = vmatprep.subr.bf16.mxu0 %v279
    %361 = vmatpush1.bf16.msra.mxu0 %v278
    %362 = vmatprep.subr.bf16.mxu0 0
    %363 = vmatpush2.bf16.msra.mxu0 0
    %364 = vmatprep.subr.bf16.mxu0 0
    %365 = vmatpush2.bf16.msra.mxu0 0
    %366 = vmatprep.subr.bf16.mxu0 0
    %367 = vmatpush2.bf16.msra.mxu0 0
    %368 = vmatprep.subr.bf16.mxu0 0
    %369 = vmatpush2.bf16.msra.mxu0 0
    %370 = vmatprep.subr.bf16.mxu0 0
    %371 = vmatpush2.bf16.msra.mxu0 0
    %372 = vmatprep.subr.bf16.mxu0 0
    %373 = vmatpush2.bf16.msra.mxu0 0
    %374 = vmatprep.subr.bf16.mxu0 0
    %375 = vmatpush2.bf16.msra.mxu0 0
    %376 = vmatprep.subr.bf16.mxu0 0
    %377 = vmatpush2.bf16.msra.mxu0 0
    %378 = vmatprep.mubr.bf16.mxu0 0
    %379 = vmatmul.mubr.bf16.gmra.mxu0 %v301
    %v380 = vpop.f32.mrf.mxu0
    %v381 = vadd.f32 %v221, %v380
    %v382 = vpop.f32.mrf.mxu0
    %v383 = vadd.f32 %v225, %v382
    %v384 = vpop.f32.mrf.mxu0
    %v385 = vadd.f32 %v221, %v384
    %v386 = vpop.f32.mrf.mxu0
    %v387 = vadd.f32 %v225, %v386
    %388 = vdwg.mxu0
    %389 = vmatprep.subr.bf16.mxu0 0
    %390 = vmatpush1.bf16.msra.mxu0 0
    %391 = vmatprep.subr.bf16.mxu0 0
    %392 = vmatpush1.bf16.msra.mxu0 0
    %393 = vmatprep.subr.bf16.mxu0 0
    %394 = vmatpush1.bf16.msra.mxu0 0
    %395 = vmatprep.subr.bf16.mxu0 0
    %396 = vmatpush1.bf16.msra.mxu0 0
    %397 = vmatprep.subr.bf16.mxu0 0
    %398 = vmatpush1.bf16.msra.mxu0 0
    %399 = vmatprep.subr.bf16.mxu0 0
    %400 = vmatpush1.bf16.msra.mxu0 0
    %401 = vmatprep.subr.bf16.mxu0 %v287
    %402 = vmatpush1.bf16.msra.mxu0 %v286
    %403 = vmatprep.subr.bf16.mxu0 %v281
    %404 = vmatpush1.bf16.msra.mxu0 %v280
    %405 = vmatprep.subr.bf16.mxu0 0
    %406 = vmatpush2.bf16.msra.mxu0 0
    %407 = vmatprep.subr.bf16.mxu0 0
    %408 = vmatpush2.bf16.msra.mxu0 0
    %409 = vmatprep.subr.bf16.mxu0 0
    %410 = vmatpush2.bf16.msra.mxu0 0
    %411 = vmatprep.subr.bf16.mxu0 0
    %412 = vmatpush2.bf16.msra.mxu0 0
    %413 = vmatprep.subr.bf16.mxu0 0
    %414 = vmatpush2.bf16.msra.mxu0 0
    %415 = vmatprep.subr.bf16.mxu0 0
    %416 = vmatpush2.bf16.msra.mxu0 0
    %417 = vmatprep.subr.bf16.mxu0 0
    %418 = vmatpush2.bf16.msra.mxu0 0
    %419 = vmatprep.subr.bf16.mxu0 0
    %420 = vmatpush2.bf16.msra.mxu0 0
    %421 = vmatprep.mubr.bf16.mxu0 0
    %422 = vmatmul.mubr.bf16.gmra.mxu0 %v301
    %v423 = vpop.f32.mrf.mxu0
    %v424 = vadd.f32 %v229, %v423
    %v425 = vpop.f32.mrf.mxu0
    %v426 = vadd.f32 %v233, %v425
    %v427 = vpop.f32.mrf.mxu0
    %v428 = vadd.f32 %v229, %v427
    %v429 = vpop.f32.mrf.mxu0
    %v430 = vadd.f32 %v233, %v429
    %431 = vdwg.mxu0
    %432 = vst [vmem:[#allocation8] sm:$0xff] %v338
    %433 = vst [vmem:[#allocation8 + $0x8] sm:$0xff] %v340
    %434 = vst [vmem:[#allocation8 + $0x10] sm:$0xff] %v381
    %435 = vst [vmem:[#allocation8 + $0x18] sm:$0xff] %v383
    %436 = vst [vmem:[#allocation8 + $0x20] sm:$0xff] %v424
    %437 = vst [vmem:[#allocation8 + $0x28] sm:$0xff] %v426
    %438 = vst [vmem:[#allocation8 + $0x30] sm:$0xff] %v342
    %439 = vst [vmem:[#allocation8 + $0x38] sm:$0xff] %v344
    %440 = vst [vmem:[#allocation8 + $0x40] sm:$0xff] %v385
    %441 = vst [vmem:[#allocation8 + $0x48] sm:$0xff] %v387
    %442 = vst [vmem:[#allocation8 + $0x50] sm:$0xff] %v428
    %443 = vst [vmem:[#allocation8 + $0x58] sm:$0xff] %v430
    // Predicated region
    $region42: #{tpu_custom_call.1} parent=1 // pred_check
      _
    $region43: #{tpu_custom_call.1} parent=1 // pred_check_branch
      %445 = sbr.rel (0) target = $region45
    $region44: #{tpu_custom_call.1} parent=1 // pred_region
      %s447 = ssub.s32 1536, 1536
      %448 = vsyncadd [#allocation4], %s447
      %s449 = sshll.u32 [#allocation8], 4
      %s450 = int_to_ptr.vmem [resolvable:$true] %s449
      %455 = dma.vmem_to_hbm [thread:$0]  %s450, 1536, %s7, [#allocation4], 768, 768, 48
    $region45: #{tpu_custom_call.1} parent=1 // pred_fallthru
      _
    // Predicated region
    $region46: #{tpu_custom_call.1} parent=1 // pred_check
      _
    $region47: #{tpu_custom_call.1} parent=1 // pred_check_branch
      %457 = sbr.rel (0) target = $region49
    $region48: #{tpu_custom_call.1} parent=1 // pred_region
      %458 = dma.done [#allocation4], 1536
    $region49: #{tpu_custom_call.1} parent=1 // pred_fallthru
      _
    %459 = vsyncpa [#allocation3], 1
    %460 = vsyncpa [#allocation6], 1
    %461 = vsyncpa [#allocation4], 1

// kernel: tpu_custom_call.1
$region0: #{tpu_custom_call.1}
  #allocation0 [shape = 'u32[]', space=smem, size = 0x4, offset = 0x4, fixed_abs, tag = 'smem constant byte address 0x4 - core index']
  #allocation1 [shape = 'u32[144,128]{1,0:T(1,128)}', space=vmem, size = 0x12000, scoped, tag = 'internal scratch']
  %s0 = inlined_call_operand.hbm [shape: f32[16,32], index: 0, kind: input, shape index: {}]
  %s1 = inlined_call_operand.hbm [shape: bf16[32,32], index: 1, kind: input, shape index: {}]
  %s2 = inlined_call_operand.vmem [shape: f32[1,32], index: 2, kind: input, shape index: {}]
  %s3 = inlined_call_operand.vmem [shape: f32[1,32], index: 3, kind: input, shape index: {}]
  %s4 = inlined_call_operand.vmem [shape: f32[1,32], index: 4, kind: input, shape index: {}]
  %s5 = inlined_call_operand.hbm [shape: bf16[32,768], index: 5, kind: input, shape index: {}]
  %s6 = inlined_call_operand.vmem [shape: f32[1,768], index: 6, kind: input, shape index: {}]
  %s7 = inlined_call_operand.hbm [shape: f32[16,768], index: 7, kind: output, shape index: {}]
  %s8 = sld [smem:[#allocation0]]
  $region50: #{tpu_custom_call.1} parent=0
    _
  %s10 = ssub.s32 1, %s8
  %s11 = scalar_select 0, %s10, %s8
  $region1: #{tpu_custom_call.1} parent=0
    #allocation2 [shape = 'u8[8192]{0}', space=vmem, size = 0x2000, scoped, tag = 'input window, operand 0, single buffered']
    #allocation3 [shape = 's32[1]{0}', space=sflag, size = 0x4, scoped, tag = 'scoped memory for tpu_custom_call.1']
    #allocation4 [shape = 's32[1]{0}', space=sflag, size = 0x4, scoped, tag = 'scoped memory for tpu_custom_call.1']
    #allocation5 [shape = 'u8[8192]{0}', space=vmem, size = 0x2000, scoped, tag = 'input window, operand 1, single buffered']
    #allocation6 [shape = 's32[1]{0}', space=sflag, size = 0x4, scoped, tag = 'scoped memory for tpu_custom_call.1']
    #allocation7 [shape = 'u8[49152]{0}', space=vmem, size = 0xc000, scoped, tag = 'input window, operand 5, single buffered']
    #allocation8 [shape = 'u8[49152]{0}', space=vmem, size = 0xc000, scoped, tag = 'output window, operand 0, single buffered']
    %12 = vsyncpa [#allocation3], 0
    %13 = vsyncpa [#allocation6], 0
    %14 = vsyncpa [#allocation4], 0
    // Predicated region
    $region2: #{tpu_custom_call.1} parent=1 // pred_check
      _
    $region3: #{tpu_custom_call.1} parent=1 // pred_check_branch
      %16 = sbr.rel (0) target = $region5
    $region4: #{tpu_custom_call.1} parent=1 // pred_region
      %s18 = ssub.s32 256, 256
      %19 = vsyncadd [#allocation3], %s18
      %s20 = sshll.u32 [#allocation2], 4
      %s21 = int_to_ptr.vmem [resolvable:$true] %s20
      %26 = dma.hbm_to_vmem [thread:$0]  %s0, 256, %s21, [#allocation3], 128, 128, 8
    $region5: #{tpu_custom_call.1} parent=1 // pred_fallthru
      _
    // Predicated region
    $region6: #{tpu_custom_call.1} parent=1 // pred_check
      _
    $region7: #{tpu_custom_call.1} parent=1 // pred_check_branch
      %28 = sbr.rel (0) target = $region9
    $region8: #{tpu_custom_call.1} parent=1 // pred_region
      %s30 = ssub.s32 256, 256
      %31 = vsyncadd [#allocation6], %s30
      %s32 = sshll.u32 [#allocation5], 4
      %s33 = int_to_ptr.vmem [resolvable:$true] %s32
      %38 = dma.hbm_to_vmem [thread:$0]  %s1, 256, %s33, [#allocation6], 64, 64, 4
    $region9: #{tpu_custom_call.1} parent=1 // pred_fallthru
      _
    // Predicated region
    $region10: #{tpu_custom_call.1} parent=1 // pred_check
      _
    $region11: #{tpu_custom_call.1} parent=1 // pred_check_branch
      %40 = sbr.rel (0) target = $region13
    $region12: #{tpu_custom_call.1} parent=1 // pred_region
      _
    $region13: #{tpu_custom_call.1} parent=1 // pred_fallthru
      _
    // Predicated region
    $region14: #{tpu_custom_call.1} parent=1 // pred_check
      _
    $region15: #{tpu_custom_call.1} parent=1 // pred_check_branch
      %42 = sbr.rel (0) target = $region17
    $region16: #{tpu_custom_call.1} parent=1 // pred_region
      _
    $region17: #{tpu_custom_call.1} parent=1 // pred_fallthru
      _
    // Predicated region
    $region18: #{tpu_custom_call.1} parent=1 // pred_check
      _
    $region19: #{tpu_custom_call.1} parent=1 // pred_check_branch
      %44 = sbr.rel (0) target = $region21
    $region20: #{tpu_custom_call.1} parent=1 // pred_region
      _
    $region21: #{tpu_custom_call.1} parent=1 // pred_fallthru
      _
    // Predicated region
    $region22: #{tpu_custom_call.1} parent=1 // pred_check
      _
    $region23: #{tpu_custom_call.1} parent=1 // pred_check_branch
      %46 = sbr.rel (0) target = $region25
    $region24: #{tpu_custom_call.1} parent=1 // pred_region
      %s48 = ssub.s32 1536, 1536
      %49 = vsyncadd [#allocation6], %s48
      %s50 = sshll.u32 [#allocation7], 4
      %s51 = int_to_ptr.vmem [resolvable:$true] %s50
      %56 = dma.hbm_to_vmem [thread:$0]  %s5, 1536, %s51, [#allocation6], 384, 384, 24
    $region25: #{tpu_custom_call.1} parent=1 // pred_fallthru
      _
    // Predicated region
    $region26: #{tpu_custom_call.1} parent=1 // pred_check
      _
    $region27: #{tpu_custom_call.1} parent=1 // pred_check_branch
      %58 = sbr.rel (0) target = $region29
    $region28: #{tpu_custom_call.1} parent=1 // pred_region
      _
    $region29: #{tpu_custom_call.1} parent=1 // pred_fallthru
      _
    // Predicated region
    $region30: #{tpu_custom_call.1} parent=1 // pred_check
      _
    $region31: #{tpu_custom_call.1} parent=1 // pred_check_branch
      %60 = sbr.rel (0) target = $region33
    $region32: #{tpu_custom_call.1} parent=1 // pred_region
      %61 = dma.done [#allocation3], 256
    $region33: #{tpu_custom_call.1} parent=1 // pred_fallthru
      _
    // Predicated region
    $region34: #{tpu_custom_call.1} parent=1 // pred_check
      _
    $region35: #{tpu_custom_call.1} parent=1 // pred_check_branch
      %63 = sbr.rel (0) target = $region37
    $region36: #{tpu_custom_call.1} parent=1 // pred_region
      %64 = dma.done [#allocation6], 256
    $region37: #{tpu_custom_call.1} parent=1 // pred_fallthru
      _
    // Predicated region
    $region38: #{tpu_custom_call.1} parent=1 // pred_check
      _
    $region39: #{tpu_custom_call.1} parent=1 // pred_check_branch
      %66 = sbr.rel (0) target = $region41
    $region40: #{tpu_custom_call.1} parent=1 // pred_region
      %67 = dma.done [#allocation6], 1536
    $region41: #{tpu_custom_call.1} parent=1 // pred_fallthru
      _
    %v69 = vld [vmem:[#allocation2] sm:$0xff]
    %v70 = vld [vmem:[#allocation2 + $0x8] sm:$0xff]
    %v71 = vpack.c.bf16 %v70, %v69
    %v72 = vld [vmem:[#allocation5] sm:$0xf]
    %v73 = vld [vmem:[#allocation5 + $0x4] sm:$0xf]
    %v74 = vld [vmem:[#allocation5 + $0x8] sm:$0xf]
    %v75 = vld [vmem:[#allocation5 + $0xc] sm:$0xf]
    %v76 = vld [vmem:[%s2] sm:$0x1]
    %v78 = vlaneseq
    %v79 = vshrl.u32 %v78, 7
    %v80 = vsub.s32 0, %v79
    %v81 = vrot.slane %v76, %v80
    %v87 = vunpack.c.l.b16 %v72
    %v88 = vunpack.c.l.b16 %v73
    %v89 = vunpack.c.l.b16 %v74
    %v90 = vunpack.c.l.b16 %v75
    %v91 = vpack.c.b16 %v88, %v87
    %v92 = vpack.c.b16 %v90, %v89
    %vm95 = vcmask 261120
    %v97 = vsel %vm95, %v71, 0
    %99 = vmatprep.subr.bf16.mxu0 0
    %100 = vmatpush1.bf16.msra.mxu0 0
    %101 = vmatprep.subr.bf16.mxu0 0
    %102 = vmatpush1.bf16.msra.mxu0 0
    %103 = vmatprep.subr.bf16.mxu0 0
    %104 = vmatpush1.bf16.msra.mxu0 0
    %105 = vmatprep.subr.bf16.mxu0 0
    %106 = vmatpush1.bf16.msra.mxu0 0
    %107 = vmatprep.subr.bf16.mxu0 0
    %108 = vmatpush1.bf16.msra.mxu0 0
    %109 = vmatprep.subr.bf16.mxu0 0
    %110 = vmatpush1.bf16.msra.mxu0 0
    %111 = vmatprep.subr.bf16.mxu0 0
    %112 = vmatpush1.bf16.msra.mxu0 %v92
    %113 = vmatprep.subr.bf16.mxu0 0
    %114 = vmatpush1.bf16.msra.mxu0 %v91
    %115 = vmatprep.subr.bf16.mxu0 0
    %116 = vmatpush2.bf16.msra.mxu0 0
    %117 = vmatprep.subr.bf16.mxu0 0
    %118 = vmatpush2.bf16.msra.mxu0 0
    %119 = vmatprep.subr.bf16.mxu0 0
    %120 = vmatpush2.bf16.msra.mxu0 0
    %121 = vmatprep.subr.bf16.mxu0 0
    %122 = vmatpush2.bf16.msra.mxu0 0
    %123 = vmatprep.subr.bf16.mxu0 0
    %124 = vmatpush2.bf16.msra.mxu0 0
    %125 = vmatprep.subr.bf16.mxu0 0
    %126 = vmatpush2.bf16.msra.mxu0 0
    %127 = vmatprep.subr.bf16.mxu0 0
    %128 = vmatpush2.bf16.msra.mxu0 0
    %129 = vmatprep.subr.bf16.mxu0 0
    %130 = vmatpush2.bf16.msra.mxu0 0
    %131 = vmatprep.mubr.bf16.mxu0 0
    %132 = vmatmul.mubr.bf16.gmra.mxu0 %v97
    %v133 = vpop.f32.mrf.mxu0
    %v134 = vadd.f32 %v81, %v133
    %v135 = vpop.f32.mrf.mxu0
    %v136 = vpop.f32.mrf.mxu0
    %v137 = vadd.f32 %v81, %v136
    %v138 = vpop.f32.mrf.mxu0
    %139 = vdwg.mxu0
    %v140 = vmul.f32 %v134, 0.5
    %v141 = vmul.f32 %v137, 0.5
    %v142 = vmul.f32 %v134, 0.70710677
    %v143 = vmul.f32 %v137, 0.70710677
    %v144 = verf.f32.pop %v142
    %v145 = verf.f32.pop %v143
    %v146 = vadd.f32 %v144, 1.0
    %v147 = vadd.f32 %v145, 1.0
    %v148 = vmul.f32 %v140, %v146
    %v149 = vmul.f32 %v141, %v147
    %v150 = vsel %vm95, %v148, 0.0
    %151 = vadd.xlane.f32.xlu0 %v150
    %v152 = vpop.xlane.xlu0 %151
    %v153 = vsel %vm95, %v149, 0.0
    %154 = vadd.xlane.f32.xlu0 %v153
    %v155 = vpop.xlane.xlu0 %154
    %v156 = vrcp.pop 32.0
    %v157 = vmul.f32 %v152, %v156
    %v158 = vmul.f32 %v155, %v156
    %v159 = vsub.f32 %v148, %v157
    %v160 = vsub.f32 %v149, %v158
    %v161 = vmul.f32 %v159, %v159
    %v162 = vmul.f32 %v160, %v160
    %v163 = vsel %vm95, %v161, 0.0
    %164 = vadd.xlane.f32.xlu0 %v163
    %v165 = vpop.xlane.xlu0 %164
    %v166 = vsel %vm95, %v162, 0.0
    %167 = vadd.xlane.f32.xlu0 %v166
    %v168 = vpop.xlane.xlu0 %167
    %v169 = vmul.f32 %v165, %v156
    %v170 = vmul.f32 %v168, %v156
    %v171 = vadd.f32 %v169, 1e-12
    %v172 = vadd.f32 %v170, 1e-12
    %v173 = vrsqrt.pop %v171
    %v174 = vrsqrt.pop %v172
    %v175 = vmul.f32 %v159, %v173
    %v176 = vmul.f32 %v160, %v174
    %v177 = vld [vmem:[%s3] sm:$0x1]
    %v179 = vlaneseq
    %v180 = vshrl.u32 %v179, 7
    %v181 = vsub.s32 0, %v180
    %v182 = vrot.slane %v177, %v181
    %v184 = vmul.f32 %v175, %v182
    %v185 = vmul.f32 %v176, %v182
    %v186 = vld [vmem:[%s4] sm:$0x1]
    %v188 = vlaneseq
    %v189 = vshrl.u32 %v188, 7
    %v190 = vsub.s32 0, %v189
    %v191 = vrot.slane %v186, %v190
    %v193 = vadd.f32 %v184, %v191
    %v194 = vadd.f32 %v185, %v191
    %v195 = vpack.c.bf16 %v194, %v193
    %v196 = vld [vmem:[#allocation7] sm:$0xff]
    %v197 = vld [vmem:[#allocation7 + $0x8] sm:$0xff]
    %v198 = vld [vmem:[#allocation7 + $0x10] sm:$0xff]
    %v199 = vld [vmem:[#allocation7 + $0x18] sm:$0xff]
    %v200 = vld [vmem:[#allocation7 + $0x20] sm:$0xff]
    %v201 = vld [vmem:[#allocation7 + $0x28] sm:$0xff]
    %v202 = vld [vmem:[#allocation7 + $0x30] sm:$0xff]
    %v203 = vld [vmem:[#allocation7 + $0x38] sm:$0xff]
    %v204 = vld [vmem:[#allocation7 + $0x40] sm:$0xff]
    %v205 = vld [vmem:[#allocation7 + $0x48] sm:$0xff]
    %v206 = vld [vmem:[#allocation7 + $0x50] sm:$0xff]
    %v207 = vld [vmem:[#allocation7 + $0x58] sm:$0xff]
    %v208 = vld [vmem:[%s6] sm:$0x3f]
    %v210 = vlaneseq
    %v211 = vshrl.u32 %v210, 7
    %v212 = vsub.s32 0, %v211
    %v213 = vrot.slane %v208, %v212
    %v214 = vlaneseq
    %v215 = vshrl.u32 %v214, 7
    %v216 = vsub.s32 1, %v215
    %v217 = vrot.slane %v208, %v216
    %v218 = vlaneseq
    %v219 = vshrl.u32 %v218, 7
    %v220 = vsub.s32 2, %v219
    %v221 = vrot.slane %v208, %v220
    %v222 = vlaneseq
    %v223 = vshrl.u32 %v222, 7
    %v224 = vsub.s32 3, %v223
    %v225 = vrot.slane %v208, %v224
    %v226 = vlaneseq
    %v227 = vshrl.u32 %v226, 7
    %v228 = vsub.s32 4, %v227
    %v229 = vrot.slane %v208, %v228
    %v230 = vlaneseq
    %v231 = vshrl.u32 %v230, 7
    %v232 = vsub.s32 5, %v231
    %v233 = vrot.slane %v208, %v232
    %v252 = vunpack.c.l.b16 %v196
    %v253 = vunpack.c.h.b16 %v196
    %v254 = vunpack.c.l.b16 %v197
    %v255 = vunpack.c.h.b16 %v197
    %v256 = vunpack.c.l.b16 %v198
    %v257 = vunpack.c.h.b16 %v198
    %v258 = vunpack.c.l.b16 %v199
    %v259 = vunpack.c.h.b16 %v199
    %v260 = vunpack.c.l.b16 %v200
    %v261 = vunpack.c.h.b16 %v200
    %v262 = vunpack.c.l.b16 %v201
    %v263 = vunpack.c.h.b16 %v201
    %v264 = vunpack.c.l.b16 %v202
    %v265 = vunpack.c.h.b16 %v202
    %v266 = vunpack.c.l.b16 %v203
    %v267 = vunpack.c.h.b16 %v203
    %v268 = vunpack.c.l.b16 %v204
    %v269 = vunpack.c.h.b16 %v204
    %v270 = vunpack.c.l.b16 %v205
    %v271 = vunpack.c.h.b16 %v205
    %v272 = vunpack.c.l.b16 %v206
    %v273 = vunpack.c.h.b16 %v206
    %v274 = vunpack.c.l.b16 %v207
    %v275 = vunpack.c.h.b16 %v207
    %v276 = vpack.c.b16 %v258, %v252
    %v277 = vpack.c.b16 %v259, %v253
    %v278 = vpack.c.b16 %v260, %v254
    %v279 = vpack.c.b16 %v261, %v255
    %v280 = vpack.c.b16 %v262, %v256
    %v281 = vpack.c.b16 %v263, %v257
    %v282 = vpack.c.b16 %v270, %v264
    %v283 = vpack.c.b16 %v271, %v265
    %v284 = vpack.c.b16 %v272, %v266
    %v285 = vpack.c.b16 %v273, %v267
    %v286 = vpack.c.b16 %v274, %v268
    %v287 = vpack.c.b16 %v275, %v269
    %v301 = vsel %vm95, %v195, 0
    %303 = vmatprep.subr.bf16.mxu0 0
    %304 = vmatpush1.bf16.msra.mxu0 0
    %305 = vmatprep.subr.bf16.mxu0 0
    %306 = vmatpush1.bf16.msra.mxu0 0
    %307 = vmatprep.subr.bf16.mxu0 0
    %308 = vmatpush1.bf16.msra.mxu0 0
    %309 = vmatprep.subr.bf16.mxu0 0
    %310 = vmatpush1.bf16.msra.mxu0 0
    %311 = vmatprep.subr.bf16.mxu0 0
    %312 = vmatpush1.bf16.msra.mxu0 0
    %313 = vmatprep.subr.bf16.mxu0 0
    %314 = vmatpush1.bf16.msra.mxu0 0
    %315 = vmatprep.subr.bf16.mxu0 %v283
    %316 = vmatpush1.bf16.msra.mxu0 %v282
    %317 = vmatprep.subr.bf16.mxu0 %v277
    %318 = vmatpush1.bf16.msra.mxu0 %v276
    %319 = vmatprep.subr.bf16.mxu0 0
    %320 = vmatpush2.bf16.msra.mxu0 0
    %321 = vmatprep.subr.bf16.mxu0 0
    %322 = vmatpush2.bf16.msra.mxu0 0
    %323 = vmatprep.subr.bf16.mxu0 0
    %324 = vmatpush2.bf16.msra.mxu0 0
    %325 = vmatprep.subr.bf16.mxu0 0
    %326 = vmatpush2.bf16.msra.mxu0 0
    %327 = vmatprep.subr.bf16.mxu0 0
    %328 = vmatpush2.bf16.msra.mxu0 0
    %329 = vmatprep.subr.bf16.mxu0 0
    %330 = vmatpush2.bf16.msra.mxu0 0
    %331 = vmatprep.subr.bf16.mxu0 0
    %332 = vmatpush2.bf16.msra.mxu0 0
    %333 = vmatprep.subr.bf16.mxu0 0
    %334 = vmatpush2.bf16.msra.mxu0 0
    %335 = vmatprep.mubr.bf16.mxu0 0
    %336 = vmatmul.mubr.bf16.gmra.mxu0 %v301
    %v337 = vpop.f32.mrf.mxu0
    %v338 = vadd.f32 %v213, %v337
    %v339 = vpop.f32.mrf.mxu0
    %v340 = vadd.f32 %v217, %v339
    %v341 = vpop.f32.mrf.mxu0
    %v342 = vadd.f32 %v213, %v341
    %v343 = vpop.f32.mrf.mxu0
    %v344 = vadd.f32 %v217, %v343
    %345 = vdwg.mxu0
    %346 = vmatprep.subr.bf16.mxu0 0
    %347 = vmatpush1.bf16.msra.mxu0 0
    %348 = vmatprep.subr.bf16.mxu0 0
    %349 = vmatpush1.bf16.msra.mxu0 0
    %350 = vmatprep.subr.bf16.mxu0 0
    %351 = vmatpush1.bf16.msra.mxu0 0
    %352 = vmatprep.subr.bf16.mxu0 0
    %353 = vmatpush1.bf16.msra.mxu0 0
    %354 = vmatprep.subr.bf16.mxu0 0
    %355 = vmatpush1.bf16.msra.mxu0 0
    %356 = vmatprep.subr.bf16.mxu0 0
    %357 = vmatpush1.bf16.msra.mxu0 0
    %358 = vmatprep.subr.bf16.mxu0 %v285
    %359 = vmatpush1.bf16.msra.mxu0 %v284
    %360 = vmatprep.subr.bf16.mxu0 %v279
    %361 = vmatpush1.bf16.msra.mxu0 %v278
    %362 = vmatprep.subr.bf16.mxu0 0
    %363 = vmatpush2.bf16.msra.mxu0 0
    %364 = vmatprep.subr.bf16.mxu0 0
    %365 = vmatpush2.bf16.msra.mxu0 0
    %366 = vmatprep.subr.bf16.mxu0 0
    %367 = vmatpush2.bf16.msra.mxu0 0
    %368 = vmatprep.subr.bf16.mxu0 0
    %369 = vmatpush2.bf16.msra.mxu0 0
    %370 = vmatprep.subr.bf16.mxu0 0
    %371 = vmatpush2.bf16.msra.mxu0 0
    %372 = vmatprep.subr.bf16.mxu0 0
    %373 = vmatpush2.bf16.msra.mxu0 0
    %374 = vmatprep.subr.bf16.mxu0 0
    %375 = vmatpush2.bf16.msra.mxu0 0
    %376 = vmatprep.subr.bf16.mxu0 0
    %377 = vmatpush2.bf16.msra.mxu0 0
    %378 = vmatprep.mubr.bf16.mxu0 0
    %379 = vmatmul.mubr.bf16.gmra.mxu0 %v301
    %v380 = vpop.f32.mrf.mxu0
    %v381 = vadd.f32 %v221, %v380
    %v382 = vpop.f32.mrf.mxu0
    %v383 = vadd.f32 %v225, %v382
    %v384 = vpop.f32.mrf.mxu0
    %v385 = vadd.f32 %v221, %v384
    %v386 = vpop.f32.mrf.mxu0
    %v387 = vadd.f32 %v225, %v386
    %388 = vdwg.mxu0
    %389 = vmatprep.subr.bf16.mxu0 0
    %390 = vmatpush1.bf16.msra.mxu0 0
    %391 = vmatprep.subr.bf16.mxu0 0
    %392 = vmatpush1.bf16.msra.mxu0 0
    %393 = vmatprep.subr.bf16.mxu0 0
    %394 = vmatpush1.bf16.msra.mxu0 0
    %395 = vmatprep.subr.bf16.mxu0 0
    %396 = vmatpush1.bf16.msra.mxu0 0
    %397 = vmatprep.subr.bf16.mxu0 0
    %398 = vmatpush1.bf16.msra.mxu0 0
    %399 = vmatprep.subr.bf16.mxu0 0
    %400 = vmatpush1.bf16.msra.mxu0 0
    %401 = vmatprep.subr.bf16.mxu0 %v287
    %402 = vmatpush1.bf16.msra.mxu0 %v286
    %403 = vmatprep.subr.bf16.mxu0 %v281
    %404 = vmatpush1.bf16.msra.mxu0 %v280
    %405 = vmatprep.subr.bf16.mxu0 0
    %406 = vmatpush2.bf16.msra.mxu0 0
    %407 = vmatprep.subr.bf16.mxu0 0
    %408 = vmatpush2.bf16.msra.mxu0 0
    %409 = vmatprep.subr.bf16.mxu0 0
    %410 = vmatpush2.bf16.msra.mxu0 0
    %411 = vmatprep.subr.bf16.mxu0 0
    %412 = vmatpush2.bf16.msra.mxu0 0
    %413 = vmatprep.subr.bf16.mxu0 0
    %414 = vmatpush2.bf16.msra.mxu0 0
    %415 = vmatprep.subr.bf16.mxu0 0
    %416 = vmatpush2.bf16.msra.mxu0 0
    %417 = vmatprep.subr.bf16.mxu0 0
    %418 = vmatpush2.bf16.msra.mxu0 0
    %419 = vmatprep.subr.bf16.mxu0 0
    %420 = vmatpush2.bf16.msra.mxu0 0
    %421 = vmatprep.mubr.bf16.mxu0 0
    %422 = vmatmul.mubr.bf16.gmra.mxu0 %v301
    %v423 = vpop.f32.mrf.mxu0
    %v424 = vadd.f32 %v229, %v423
    %v425 = vpop.f32.mrf.mxu0
    %v426 = vadd.f32 %v233, %v425
    %v427 = vpop.f32.mrf.mxu0
    %v428 = vadd.f32 %v229, %v427
    %v429 = vpop.f32.mrf.mxu0
    %v430 = vadd.f32 %v233, %v429
    %431 = vdwg.mxu0
    %432 = vst [vmem:[#allocation8] sm:$0xff] %v338
    %433 = vst [vmem:[#allocation8 + $0x8] sm:$0xff] %v340
    %434 = vst [vmem:[#allocation8 + $0x10] sm:$0xff] %v381
    %435 = vst [vmem:[#allocation8 + $0x18] sm:$0xff] %v383
    %436 = vst [vmem:[#allocation8 + $0x20] sm:$0xff] %v424
    %437 = vst [vmem:[#allocation8 + $0x28] sm:$0xff] %v426
    %438 = vst [vmem:[#allocation8 + $0x30] sm:$0xff] %v342
    %439 = vst [vmem:[#allocation8 + $0x38] sm:$0xff] %v344
    %440 = vst [vmem:[#allocation8 + $0x40] sm:$0xff] %v385
    %441 = vst [vmem:[#allocation8 + $0x48] sm:$0xff] %v387
    %442 = vst [vmem:[#allocation8 + $0x50] sm:$0xff] %v428
    %443 = vst [vmem:[#allocation8 + $0x58] sm:$0xff] %v430
    // Predicated region
    $region42: #{tpu_custom_call.1} parent=1 // pred_check
      _
    $region43: #{tpu_custom_call.1} parent=1 // pred_check_branch
      %445 = sbr.rel (0) target = $region45
    $region44: #{tpu_custom_call.1} parent=1 // pred_region
      %s447 = ssub.s32 1536, 1536
      %448 = vsyncadd [#allocation4], %s447
      %s449 = sshll.u32 [#allocation8], 4
      %s450 = int_to_ptr.vmem [resolvable:$true] %s449
      %455 = dma.vmem_to_hbm [thread:$0]  %s450, 1536, %s7, [#allocation4], 768, 768, 48
    $region45: #{tpu_custom_call.1} parent=1 // pred_fallthru
      _
    // Predicated region
    $region46: #{tpu_custom_call.1} parent=1 // pred_check
      _
    $region47: #{tpu_custom_call.1} parent=1 // pred_check_branch
      %457 = sbr.rel (0) target = $region49
    $region48: #{tpu_custom_call.1} parent=1 // pred_region
      %458 = dma.done [#allocation4], 1536
    $region49: #{tpu_custom_call.1} parent=1 // pred_fallthru
      _
    %459 = vsyncpa [#allocation3], 1
    %460 = vsyncpa [#allocation6], 1
    %461 = vsyncpa [#allocation4], 1

</llo_original>
